<compile_context>
chip_gen: v7x
topology: tpu7x:2x2x1
jax: 0.10.0
libtpu: 0.0.40
codegen_flags: <defaults>
</compile_context>

<pallas_src>
import functools

import jax
import jax.numpy as jnp
from jax.experimental import pallas as pl
from jax.experimental.pallas import tpu as pltpu

Z_DIM = 64
HIDDEN = 256
IMG_DIM = 784
DEFAULT_BLOCK_B = 512      # cap on the batch tile (review: 512-1024 is the sweet spot)


def _round_up(x, m):
    return (x + m - 1) // m * m


def _supports_bf16_epilogue():
    """bf16 VPU/EUP exists on v6e/v7x; keep the epilogue f32 on v5e and older."""
    try:
        kind = jax.devices()[0].device_kind.lower()
    except Exception:  # pragma: no cover - defensive
        return False
    return ("v6" in kind) or ("v7" in kind) or ("7x" in kind)


def _choose_batch_tile(batch, block_b):
    """Pick (tb, b_pad): sublane-aligned, >=2 grid steps when possible, low padding waste."""
    b_al = _round_up(max(batch, 8), 8)
    if b_al >= 16:
        tb = min(block_b, _round_up(pl.cdiv(b_al, 2), 8))   # at least 2 grid steps
    else:
        tb = b_al
    n_steps = pl.cdiv(b_al, tb)
    tb = _round_up(pl.cdiv(b_al, n_steps), 8)                # shrink -> waste < 8*n_steps rows
    return tb, n_steps * tb


def _generator_kernel(x_ref, w1_ref, b1_ref, w2_ref, b2_ref, o_ref, *, bf16_epilogue):
    # In-kernel bf16 cast of x (hidden under the matmuls; avoids a wrapper HBM pass).
    x = x_ref[...].astype(jnp.bfloat16)
    # Layer 1 on the MXU: bf16 inputs, f32 accumulation.
    h = jnp.dot(x, w1_ref[...], preferred_element_type=jnp.float32)
    h = h + b1_ref[...]                       # (1, HIDDEN) f32 bias broadcast
    h = jnp.where(h >= 0, h, 0.1 * h)         # LeakyReLU(0.1) in f32
    # Layer 2: bf16 activations back into the MXU, f32 accumulation.
    y = jnp.dot(h.astype(jnp.bfloat16), w2_ref[...],
                preferred_element_type=jnp.float32)
    if bf16_epilogue:
        # v6e/v7x: bf16 bias-add + tanh (bf16 VPU/EUP) -> halves the EUP/VPU work
        # and the vst traffic on the epilogue, which is the next binding slot.
        yb = y.astype(jnp.bfloat16) + b2_ref[...].astype(jnp.bfloat16)
        o_ref[...] = jnp.tanh(yb).astype(o_ref.dtype)
    else:
        # v5e: f32 epilogue (no bf16 VPU/EUP); only the final store is bf16.
        o_ref[...] = jnp.tanh(y + b2_ref[...]).astype(o_ref.dtype)


def prepare_params(w1, b1, w2, b2):
    """One-time prep: weights to bf16 (streamed to the MXU), biases stay f32."""
    return (w1.astype(jnp.bfloat16), b1.astype(jnp.float32),
            w2.astype(jnp.bfloat16), b2.astype(jnp.float32))


@functools.partial(jax.jit, static_argnames=("block_b", "bf16_epilogue"))
def _generator_forward_jit(x, w1_bf, b1, w2_bf, b2, *, block_b, bf16_epilogue):
    batch = x.shape[0]
    tb, b_pad = _choose_batch_tile(batch, block_b)
    if b_pad != batch:
        x = jnp.pad(x, ((0, b_pad - batch), (0, 0)))

    kernel = functools.partial(_generator_kernel, bf16_epilogue=bf16_epilogue)
    grid = (b_pad // tb,)
    out = pl.pallas_call(
        kernel,
        out_shape=jax.ShapeDtypeStruct((b_pad, IMG_DIM), jnp.bfloat16),
        grid_spec=pl.GridSpec(
            grid=grid,
            in_specs=[
                # Activations: tiled over batch, double-buffered by Pallas.
                pl.BlockSpec((tb, Z_DIM), lambda i: (i, 0)),
                # Weights / biases: constant index_map -> resident in VMEM.
                pl.BlockSpec((Z_DIM, HIDDEN), lambda i: (0, 0)),
                pl.BlockSpec((1, HIDDEN), lambda i: (0, 0)),
                pl.BlockSpec((HIDDEN, IMG_DIM), lambda i: (0, 0)),
                pl.BlockSpec((1, IMG_DIM), lambda i: (0, 0)),
            ],
            out_specs=pl.BlockSpec((tb, IMG_DIM), lambda i: (i, 0)),
        ),
        compiler_params=pltpu.CompilerParams(
            dimension_semantics=("parallel",),
        ),
    )(x, w1_bf, b1, w2_bf, b2)

    if b_pad != batch:
        out = out[:batch]
    return out


def generator_forward(x, w1_bf, b1, w2_bf, b2, *, block_b=DEFAULT_BLOCK_B,
                      bf16_epilogue=None):
    """x: (B, Z_DIM) f32 -> (B, IMG_DIM) bf16.  Weights from prepare_params."""
    if bf16_epilogue is None:
        bf16_epilogue = _supports_bf16_epilogue()
    return _generator_forward_jit(x, w1_bf, b1, w2_bf, b2,
                                  block_b=block_b, bf16_epilogue=bool(bf16_epilogue))


def init_params(key):
    """Mimics nn.Linear's default U(-1/sqrt(fan_in), 1/sqrt(fan_in)) init (f32)."""
    k1, k2, k3, k4 = jax.random.split(key, 4)
    lim1 = 1.0 / jnp.sqrt(Z_DIM)
    lim2 = 1.0 / jnp.sqrt(HIDDEN)
    w1 = jax.random.uniform(k1, (Z_DIM, HIDDEN), jnp.float32, -lim1, lim1)
    b1 = jax.random.uniform(k2, (1, HIDDEN), jnp.float32, -lim1, lim1)
    w2 = jax.random.uniform(k3, (HIDDEN, IMG_DIM), jnp.float32, -lim2, lim2)
    b2 = jax.random.uniform(k4, (1, IMG_DIM), jnp.float32, -lim2, lim2)
    return w1, b1, w2, b2


def reference_forward(x, w1, b1, w2, b2):
    h = x @ w1 + b1
    h = jnp.where(h >= 0, h, 0.1 * h)
    return jnp.tanh(h @ w2 + b2)


if __name__ == "__main__":
    key = jax.random.PRNGKey(0)
    pkey, xkey = jax.random.split(key)
    w1, b1, w2, b2 = init_params(pkey)
    params = prepare_params(w1, b1, w2, b2)

    # Small primary check (single tile, no padding).
    batch = 16
    x = jax.random.normal(xkey, (batch, Z_DIM), jnp.float32)
    out = jax.block_until_ready(generator_forward(x, *params))
    ref = reference_forward(x, w1, b1, w2, b2)
    assert out.shape == (batch, IMG_DIM), out.shape
    assert out.dtype == jnp.bfloat16, out.dtype
    # bf16 weights/activations/output -> looser tolerance vs the f32 reference.
    assert jnp.max(jnp.abs(out.astype(jnp.float32) - ref)) < 3e-2, "mismatch vs reference"

    # Non-tile-aligned batch: exercises the >=2-step grid + row-padding path.
    batch2 = 200
    x2 = jax.random.normal(jax.random.PRNGKey(1), (batch2, Z_DIM), jnp.float32)
    out2 = jax.block_until_ready(generator_forward(x2, *params))
    ref2 = reference_forward(x2, w1, b1, w2, b2)
    assert out2.shape == (batch2, IMG_DIM), out2.shape
    assert jnp.max(jnp.abs(out2.astype(jnp.float32) - ref2)) < 3e-2, "padded-batch mismatch"

    print("KERNEL_OK")
</pallas_src>

<mosaic_0001>
module attributes {stable_mosaic.version = 11 : i64} {
  func.func @_generator_kernel(%arg0: i32, %arg1: memref<8x64xf32, #tpu.memory_space<vmem>>, %arg2: memref<64x256xbf16, #tpu.memory_space<vmem>>, %arg3: memref<1x256xf32, #tpu.memory_space<vmem>>, %arg4: memref<256x784xbf16, #tpu.memory_space<vmem>>, %arg5: memref<1x784xf32, #tpu.memory_space<vmem>>, %arg6: memref<8x784xbf16, #tpu.memory_space<vmem>>) attributes {dimension_semantics = [#tpu.dimension_semantics<parallel>], iteration_bounds = array<i64: 2>, scalar_prefetch = 0 : i64, scratch_operands = 0 : i64, tpu.core_type = #tpu.core_type<tc>, window_params = [{transform_indices = @transform_0, window_bounds = array<i64: 8, 64>}, {pipeline_mode = #tpu.pipeline_mode<synchronous>, transform_indices = @transform_1, window_bounds = array<i64: 64, 256>}, {pipeline_mode = #tpu.pipeline_mode<synchronous>, transform_indices = @transform_2, window_bounds = array<i64: 1, 256>}, {pipeline_mode = #tpu.pipeline_mode<synchronous>, transform_indices = @transform_3, window_bounds = array<i64: 256, 784>}, {pipeline_mode = #tpu.pipeline_mode<synchronous>, transform_indices = @transform_4, window_bounds = array<i64: 1, 784>}, {transform_indices = @transform_5, window_bounds = array<i64: 8, 784>}]} {
    %c0 = arith.constant 0 : index
    %c0_0 = arith.constant 0 : index
    %0 = vector.load %arg1[%c0, %c0_0] : memref<8x64xf32, #tpu.memory_space<vmem>>, vector<8x64xf32>
    %1 = arith.truncf %0 : vector<8x64xf32> to vector<8x64xbf16>
    %c0_1 = arith.constant 0 : index
    %c0_2 = arith.constant 0 : index
    %2 = vector.load %arg2[%c0_1, %c0_2] : memref<64x256xbf16, #tpu.memory_space<vmem>>, vector<64x256xbf16>
    %cst = arith.constant dense<0.000000e+00> : vector<8x256xf32>
    %3 = tpu.matmul %1, %2, %cst {dimension_numbers = #tpu.dot_dimension_numbers<[1], [0], [0], [1], [0, 0, 1, 1], [], []>} : vector<8x64xbf16>, vector<64x256xbf16>, vector<8x256xf32> -> vector<8x256xf32>
    %c0_3 = arith.constant 0 : index
    %c0_4 = arith.constant 0 : index
    %4 = vector.load %arg3[%c0_3, %c0_4] : memref<1x256xf32, #tpu.memory_space<vmem>>, vector<1x256xf32>
    %5 = vector.broadcast %4 : vector<1x256xf32> to vector<8x256xf32>
    %6 = arith.addf %3, %5 : vector<8x256xf32>
    %cst_5 = arith.constant 0.000000e+00 : f32
    %7 = vector.broadcast %cst_5 : f32 to vector<8x256xf32>
    %8 = arith.cmpf oge, %6, %7 : vector<8x256xf32>
    %cst_6 = arith.constant 1.000000e-01 : f32
    %9 = vector.broadcast %cst_6 : f32 to vector<8x256xf32>
    %10 = arith.mulf %9, %6 : vector<8x256xf32>
    %11 = arith.select %8, %6, %10 : vector<8x256xi1>, vector<8x256xf32>
    %12 = arith.truncf %11 : vector<8x256xf32> to vector<8x256xbf16>
    %c0_7 = arith.constant 0 : index
    %c0_8 = arith.constant 0 : index
    %13 = vector.load %arg4[%c0_7, %c0_8] : memref<256x784xbf16, #tpu.memory_space<vmem>>, vector<256x784xbf16>
    %cst_9 = arith.constant dense<0.000000e+00> : vector<8x784xf32>
    %14 = tpu.matmul %12, %13, %cst_9 {dimension_numbers = #tpu.dot_dimension_numbers<[1], [0], [0], [1], [0, 0, 1, 1], [], []>} : vector<8x256xbf16>, vector<256x784xbf16>, vector<8x784xf32> -> vector<8x784xf32>
    %c0_10 = arith.constant 0 : index
    %c0_11 = arith.constant 0 : index
    %15 = vector.load %arg5[%c0_10, %c0_11] : memref<1x784xf32, #tpu.memory_space<vmem>>, vector<1x784xf32>
    %16 = vector.broadcast %15 : vector<1x784xf32> to vector<8x784xf32>
    %17 = arith.addf %14, %16 : vector<8x784xf32>
    %18 = math.tanh %17 : vector<8x784xf32>
    %19 = arith.truncf %18 : vector<8x784xf32> to vector<8x784xbf16>
    %c0_12 = arith.constant 0 : index
    %c0_13 = arith.constant 0 : index
    %20 = vector.load %arg6[%c0_12, %c0_13] : memref<8x784xbf16, #tpu.memory_space<vmem>>, vector<8x784xbf16>
    tpu.vector_store %arg6[%c0_12, %c0_13], %19 {strides = array<i32>} : memref<8x784xbf16, #tpu.memory_space<vmem>>, vector<8x784xbf16>,
    return
  }
  func.func @transform_0(%arg0: i32) -> (i32, i32) {
    %c0_i32 = arith.constant 0 : i32
    %c0_i32_0 = arith.constant 0 : i32
    return %arg0, %c0_i32 : i32, i32
  }
  func.func @transform_1(%arg0: i32) -> (i32, i32) {
    %c0_i32 = arith.constant 0 : i32
    %c0_i32_0 = arith.constant 0 : i32
    %c0_i32_1 = arith.constant 0 : i32
    return %c0_i32, %c0_i32_0 : i32, i32
  }
  func.func @transform_2(%arg0: i32) -> (i32, i32) {
    %c0_i32 = arith.constant 0 : i32
    %c0_i32_0 = arith.constant 0 : i32
    %c0_i32_1 = arith.constant 0 : i32
    return %c0_i32, %c0_i32_0 : i32, i32
  }
  func.func @transform_3(%arg0: i32) -> (i32, i32) {
    %c0_i32 = arith.constant 0 : i32
    %c0_i32_0 = arith.constant 0 : i32
    %c0_i32_1 = arith.constant 0 : i32
    return %c0_i32, %c0_i32_0 : i32, i32
  }
  func.func @transform_4(%arg0: i32) -> (i32, i32) {
    %c0_i32 = arith.constant 0 : i32
    %c0_i32_0 = arith.constant 0 : i32
    %c0_i32_1 = arith.constant 0 : i32
    return %c0_i32, %c0_i32_0 : i32, i32
  }
  func.func @transform_5(%arg0: i32) -> (i32, i32) {
    %c0_i32 = arith.constant 0 : i32
    %c0_i32_0 = arith.constant 0 : i32
    return %arg0, %c0_i32 : i32, i32
  }
}

</mosaic_0001>

<llo_original>
// kernel: _generator_forward_jit.1
$region0: #{_generator_forward_jit.1}
  #allocation0 [shape = 'u32[]', space=smem, size = 0x4, offset = 0x4, fixed_abs, tag = 'smem constant byte address 0x4 - core index']
  #allocation1 [shape = 'u32[144,128]{1,0:T(1,128)}', space=vmem, size = 0x12000, scoped, tag = 'internal scratch']
  %s0 = inlined_call_operand.vmem [shape: f32[16,64], index: 0, kind: input, shape index: {}]
  %s1 = inlined_call_operand.vmem [shape: bf16[64,256], index: 1, kind: input, shape index: {}]
  %s2 = inlined_call_operand.vmem [shape: f32[1,256], index: 2, kind: input, shape index: {}]
  %s3 = inlined_call_operand.vmem [shape: bf16[256,784], index: 3, kind: input, shape index: {}]
  %s4 = inlined_call_operand.vmem [shape: f32[1,784], index: 4, kind: input, shape index: {}]
  %s5 = inlined_call_operand.hbm [shape: bf16[16,784], index: 5, kind: output, shape index: {}]
  %s6 = sld [smem:[#allocation0]]
  $region53: #{_generator_forward_jit.1} parent=0
    _
  %s8 = ssub.s32 1, %s6
  %s9 = scalar_select 0, %s8, %s6
  $region1: #{_generator_forward_jit.1} parent=0
    #allocation2 [shape = 'u8[28672]{0}', space=vmem, size = 0x7000, scoped, tag = 'output window, operand 0']
    #allocation3 [shape = 's32[2]{0}', space=sflag, size = 0x8, scoped, tag = 'scoped memory for _generator_forward_jit.1']
    %10 = vsyncpa [#allocation3], 0
    %s11 = scalar_lea.sflag [#allocation3], 1
    %12 = vsyncpa %s11, 0
    loop: start=0, step=1, limit=4
    $region2: #{_generator_forward_jit.1} parent=1 // loop_pre_header
      _
    $region3: #{_generator_forward_jit.1} parent=1 // loop_header
      %s14 = sphi 0, %s18
      %p15 = scmp.ge.s32.totalorder %s14, 4
      %s24 = sphi 0, %s26
      %s27 = sphi 0, %s24
      %s28 = sphi 0, %s27
      %s44 = sphi 0, %s28
      %s48 = sphi 0, %s48
      %s50 = sphi 0, %s48
      %s51 = sphi 0, %s50
      %s65 = sphi 0, %s51
      %s69 = sphi 0, %s69
      %s71 = sphi 0, %s69
      %s72 = sphi 0, %s71
      %s86 = sphi 0, %s72
      %s90 = sphi 0, %s90
      %s92 = sphi 0, %s90
      %s93 = sphi 0, %s92
      %s107 = sphi 0, %s93
      %s111 = sphi 0, %s111
      %s113 = sphi 0, %s111
      %s114 = sphi 0, %s113
      %s128 = sphi 0, %s114
      %s134 = sphi 0, %s136
      %s137 = sphi 0, %s134
      %s138 = sphi 0, %s137
      %s154 = sphi 0, %s138
    $region4: #{_generator_forward_jit.1} parent=1 // loop_header_branch
      %17 = sbr.rel (%p15) target = $region8
    $region5: #{_generator_forward_jit.1} parent=1 // loop_body
      %s19 = ssub.s32 %s14, 1
      %s20 = ssub.s32 %s14, 2
      %s21 = sadd.s32 %s14, 1
      %s22 = ssub.s32 %s14, %s21
      %p23 = scmp.eq.s32.totalorder %s22, 0
      %s25 = sadd.s32 %s24, 1
      %s26 = scalar_select %p23, %s24, %s25
      %p29 = pneg %p23
      %p30 = scmp.eq.s32.totalorder %s14, 1
      %p31 = por %p29, %p30
      %p32 = scmp.ne.s32.totalorder %s24, %s27
      %p33 = scmp.eq.s32.totalorder %s14, 0
      %p34 = por %p32, %p33
      %p35 = scmp.ne.s32.totalorder %s24, %s27
      %p36 = scmp.eq.s32.totalorder %s19, 1
      %p37 = por %p35, %p36
      %p38 = scmp.ne.s32.totalorder %s27, %s28
      %p39 = scmp.eq.s32.totalorder %s19, 0
      %p40 = por %p38, %p39
      %p41 = scmp.ne.s32.totalorder %s27, %s28
      %p42 = scmp.eq.s32.totalorder %s20, 1
      %p43 = por %p41, %p42
      %p45 = scmp.ne.s32.totalorder %s28, %s44
      %p46 = scmp.eq.s32.totalorder %s20, 0
      %p47 = por %p45, %p46
      %s49 = sadd.s32 %s48, 1
      %p52 = scmp.eq.s32.totalorder %s14, 1
      %p53 = scmp.ne.s32.totalorder %s48, %s50
      %p54 = scmp.eq.s32.totalorder %s14, 0
      %p55 = por %p53, %p54
      %p56 = scmp.ne.s32.totalorder %s48, %s50
      %p57 = scmp.eq.s32.totalorder %s19, 1
      %p58 = por %p56, %p57
      %p59 = scmp.ne.s32.totalorder %s50, %s51
      %p60 = scmp.eq.s32.totalorder %s19, 0
      %p61 = por %p59, %p60
      %p62 = scmp.ne.s32.totalorder %s50, %s51
      %p63 = scmp.eq.s32.totalorder %s20, 1
      %p64 = por %p62, %p63
      %p66 = scmp.ne.s32.totalorder %s51, %s65
      %p67 = scmp.eq.s32.totalorder %s20, 0
      %p68 = por %p66, %p67
      %s70 = sadd.s32 %s69, 1
      %p73 = scmp.eq.s32.totalorder %s14, 1
      %p74 = scmp.ne.s32.totalorder %s69, %s71
      %p75 = scmp.eq.s32.totalorder %s14, 0
      %p76 = por %p74, %p75
      %p77 = scmp.ne.s32.totalorder %s69, %s71
      %p78 = scmp.eq.s32.totalorder %s19, 1
      %p79 = por %p77, %p78
      %p80 = scmp.ne.s32.totalorder %s71, %s72
      %p81 = scmp.eq.s32.totalorder %s19, 0
      %p82 = por %p80, %p81
      %p83 = scmp.ne.s32.totalorder %s71, %s72
      %p84 = scmp.eq.s32.totalorder %s20, 1
      %p85 = por %p83, %p84
      %p87 = scmp.ne.s32.totalorder %s72, %s86
      %p88 = scmp.eq.s32.totalorder %s20, 0
      %p89 = por %p87, %p88
      %s91 = sadd.s32 %s90, 1
      %p94 = scmp.eq.s32.totalorder %s14, 1
      %p95 = scmp.ne.s32.totalorder %s90, %s92
      %p96 = scmp.eq.s32.totalorder %s14, 0
      %p97 = por %p95, %p96
      %p98 = scmp.ne.s32.totalorder %s90, %s92
      %p99 = scmp.eq.s32.totalorder %s19, 1
      %p100 = por %p98, %p99
      %p101 = scmp.ne.s32.totalorder %s92, %s93
      %p102 = scmp.eq.s32.totalorder %s19, 0
      %p103 = por %p101, %p102
      %p104 = scmp.ne.s32.totalorder %s92, %s93
      %p105 = scmp.eq.s32.totalorder %s20, 1
      %p106 = por %p104, %p105
      %p108 = scmp.ne.s32.totalorder %s93, %s107
      %p109 = scmp.eq.s32.totalorder %s20, 0
      %p110 = por %p108, %p109
      %s112 = sadd.s32 %s111, 1
      %p115 = scmp.eq.s32.totalorder %s14, 1
      %p116 = scmp.ne.s32.totalorder %s111, %s113
      %p117 = scmp.eq.s32.totalorder %s14, 0
      %p118 = por %p116, %p117
      %p119 = scmp.ne.s32.totalorder %s111, %s113
      %p120 = scmp.eq.s32.totalorder %s19, 1
      %p121 = por %p119, %p120
      %p122 = scmp.ne.s32.totalorder %s113, %s114
      %p123 = scmp.eq.s32.totalorder %s19, 0
      %p124 = por %p122, %p123
      %p125 = scmp.ne.s32.totalorder %s113, %s114
      %p126 = scmp.eq.s32.totalorder %s20, 1
      %p127 = por %p125, %p126
      %p129 = scmp.ne.s32.totalorder %s114, %s128
      %p130 = scmp.eq.s32.totalorder %s20, 0
      %p131 = por %p129, %p130
      %s132 = ssub.s32 %s14, %s21
      %p133 = scmp.eq.s32.totalorder %s132, 0
      %s135 = sadd.s32 %s134, 1
      %s136 = scalar_select %p133, %s134, %s135
      %p139 = pneg %p133
      %p140 = scmp.eq.s32.totalorder %s14, 1
      %p141 = por %p139, %p140
      %p142 = scmp.ne.s32.totalorder %s134, %s137
      %p143 = scmp.eq.s32.totalorder %s14, 0
      %p144 = por %p142, %p143
      %p145 = scmp.ne.s32.totalorder %s134, %s137
      %p146 = scmp.eq.s32.totalorder %s19, 1
      %p147 = por %p145, %p146
      %p148 = scmp.ne.s32.totalorder %s137, %s138
      %p149 = scmp.eq.s32.totalorder %s19, 0
      %p150 = por %p148, %p149
      %p151 = scmp.ne.s32.totalorder %s137, %s138
      %p152 = scmp.eq.s32.totalorder %s20, 1
      %p153 = por %p151, %p152
      %p155 = scmp.ne.s32.totalorder %s138, %s154
      %p156 = scmp.eq.s32.totalorder %s20, 0
      %p157 = por %p155, %p156
      %p158 = scmp.le.s32.totalorder 1, %s14
      %p159 = scmp.lt.s32.totalorder %s14, 3
      %p160 = pnand %p158, %p159
      %p161 = pneg %p160
      // Predicated region
      $region9: #{_generator_forward_jit.1} parent=5 // pred_check
        _
      $region10: #{_generator_forward_jit.1} parent=5 // pred_check_branch
        %163 = sbr.rel (%p160) target = $region12
      $region11: #{_generator_forward_jit.1} parent=5 // pred_region
        %s164 = ssub.s32 %s14, 1
        // Predicated region
        $region13: #{_generator_forward_jit.1} parent=11 // pred_check
          %p165 = pneg %p61
        $region14: #{_generator_forward_jit.1} parent=11 // pred_check_branch
          %167 = sbr.rel (%p165) target = $region16
        $region15: #{_generator_forward_jit.1} parent=11 // pred_region
          _
        $region16: #{_generator_forward_jit.1} parent=11 // pred_fallthru
          _
        // Predicated region
        $region17: #{_generator_forward_jit.1} parent=11 // pred_check
          %p168 = pneg %p82
        $region18: #{_generator_forward_jit.1} parent=11 // pred_check_branch
          %170 = sbr.rel (%p168) target = $region20
        $region19: #{_generator_forward_jit.1} parent=11 // pred_region
          _
        $region20: #{_generator_forward_jit.1} parent=11 // pred_fallthru
          _
        // Predicated region
        $region21: #{_generator_forward_jit.1} parent=11 // pred_check
          %p171 = pneg %p103
        $region22: #{_generator_forward_jit.1} parent=11 // pred_check_branch
          %173 = sbr.rel (%p171) target = $region24
        $region23: #{_generator_forward_jit.1} parent=11 // pred_region
          _
        $region24: #{_generator_forward_jit.1} parent=11 // pred_fallthru
          _
        // Predicated region
        $region25: #{_generator_forward_jit.1} parent=11 // pred_check
          %p174 = pneg %p124
        $region26: #{_generator_forward_jit.1} parent=11 // pred_check_branch
          %176 = sbr.rel (%p174) target = $region28
        $region27: #{_generator_forward_jit.1} parent=11 // pred_region
          _
        $region28: #{_generator_forward_jit.1} parent=11 // pred_fallthru
          _
      $region12: #{_generator_forward_jit.1} parent=5 // pred_fallthru
        _
      %p177 = scmp.lt.s32.totalorder %s14, 2
      // Predicated region
      $region29: #{_generator_forward_jit.1} parent=5 // pred_check
        %p178 = pneg %p177
      $region30: #{_generator_forward_jit.1} parent=5 // pred_check_branch
        %180 = sbr.rel (%p178) target = $region32
      $region31: #{_generator_forward_jit.1} parent=5 // pred_region
        // Predicated region
        $region33: #{_generator_forward_jit.1} parent=31 // pred_check
          %p181 = pneg %p34
        $region34: #{_generator_forward_jit.1} parent=31 // pred_check_branch
          %183 = sbr.rel (%p181) target = $region36
        $region35: #{_generator_forward_jit.1} parent=31 // pred_region
          %p184 = scmp.lt.s32.totalorder %s14, 1
          %s185 = scalar_select %p184, %s14, 1
          %s186 = smul.addr %s185, 8
          %s187 = scalar_lea.vmem %s0, %s186
        $region36: #{_generator_forward_jit.1} parent=31 // pred_fallthru
          _
      $region32: #{_generator_forward_jit.1} parent=5 // pred_fallthru
        _
      %p188 = scmp.le.s32.totalorder 1, %s14
      %p189 = scmp.lt.s32.totalorder %s14, 3
      %p190 = pnand %p188, %p189
      %p191 = pneg %p190
      // Predicated region
      $region37: #{_generator_forward_jit.1} parent=5 // pred_check
        _
      $region38: #{_generator_forward_jit.1} parent=5 // pred_check_branch
        %193 = sbr.rel (%p190) target = $region40
      $region39: #{_generator_forward_jit.1} parent=5 // pred_region
        %s194 = ssub.s32 %s14, 1
        %p195 = scmp.lt.s32.totalorder %s19, 1
        %s196 = scalar_select %p195, %s19, 1
        %s197 = smul.addr %s196, 8
        %s198 = scalar_lea.vmem %s0, %s197
        %p199 = pneg %p40
        %p200 = pneg %p37
        %p201 = pneg %p61
        %p202 = pneg %p58
        %p203 = pneg %p82
        %p204 = pneg %p79
        %p205 = pneg %p103
        %p206 = pneg %p100
        %p207 = pneg %p124
        %p208 = pneg %p121
        %p209 = pneg %p150
        %p210 = pneg %p147
        %s211 = sand.u32 %s137, 1
        %s212 = scalar_lea.sflag [#allocation3], %s211
        %s213 = sand.u32 %s137, 1
        %s214 = smul.addr %s213, 28
        %s215 = scalar_lea.vmem [#allocation2], %s214
        %p216 = scmp.lt.s32.totalorder %s19, 1
        %s217 = scalar_select %p216, %s19, 1
        %s218 = smul.addr %s217, 8
        %s219 = scalar_lea.vmem %s0, %s218
        %v221 = vld [vmem:[%s219] sm:$0xff]
        %v222 = vpack.c.bf16 %v221, %v221
        %v223 = vld [vmem:[%s1] sm:$0xff]
        %v224 = vld [vmem:[%s1 + $0x8] sm:$0xff]
        %v225 = vld [vmem:[%s1 + $0x10] sm:$0xff]
        %v226 = vld [vmem:[%s1 + $0x18] sm:$0xff]
        %v227 = vld [vmem:[%s1 + $0x20] sm:$0xff]
        %v228 = vld [vmem:[%s1 + $0x28] sm:$0xff]
        %v229 = vld [vmem:[%s1 + $0x30] sm:$0xff]
        %v230 = vld [vmem:[%s1 + $0x38] sm:$0xff]
        %v231 = vld [vmem:[%s2] sm:$0x3]
        %v233 = vlaneseq
        %v234 = vshrl.u32 %v233, 7
        %v235 = vsub.s32 0, %v234
        %v236 = vrot.slane %v231, %v235
        %v237 = vlaneseq
        %v238 = vshrl.u32 %v237, 7
        %v239 = vsub.s32 1, %v238
        %v240 = vrot.slane %v231, %v239
        %v251 = vunpack.c.l.b16 %v223
        %v252 = vunpack.c.h.b16 %v223
        %v253 = vunpack.c.l.b16 %v224
        %v254 = vunpack.c.h.b16 %v224
        %v255 = vunpack.c.l.b16 %v225
        %v256 = vunpack.c.h.b16 %v225
        %v257 = vunpack.c.l.b16 %v226
        %v258 = vunpack.c.h.b16 %v226
        %v259 = vunpack.c.l.b16 %v227
        %v260 = vunpack.c.h.b16 %v227
        %v261 = vunpack.c.l.b16 %v228
        %v262 = vunpack.c.h.b16 %v228
        %v263 = vunpack.c.l.b16 %v229
        %v264 = vunpack.c.h.b16 %v229
        %v265 = vunpack.c.l.b16 %v230
        %v266 = vunpack.c.h.b16 %v230
        %v267 = vpack.c.b16 %v253, %v251
        %v268 = vpack.c.b16 %v254, %v252
        %v269 = vpack.c.b16 %v257, %v255
        %v270 = vpack.c.b16 %v258, %v256
        %v271 = vpack.c.b16 %v261, %v259
        %v272 = vpack.c.b16 %v262, %v260
        %v273 = vpack.c.b16 %v265, %v263
        %v274 = vpack.c.b16 %v266, %v264
        %vm283 = vcmask 523264
        %v285 = vsel %vm283, %v222, 0
        %287 = vmatprep.subr.bf16.mxu0 %v268
        %288 = vmatpush1.bf16.msra.mxu0 %v267
        %289 = vmatprep.subr.bf16.mxu0 %v270
        %290 = vmatpush1.bf16.msra.mxu0 %v269
        %291 = vmatprep.subr.bf16.mxu0 %v272
        %292 = vmatpush1.bf16.msra.mxu0 %v271
        %293 = vmatprep.subr.bf16.mxu0 %v274
        %294 = vmatpush1.bf16.msra.mxu0 %v273
        %295 = vmatprep.subr.bf16.mxu0 0
        %296 = vmatpush1.bf16.msra.mxu0 0
        %297 = vmatprep.subr.bf16.mxu0 0
        %298 = vmatpush1.bf16.msra.mxu0 0
        %299 = vmatprep.subr.bf16.mxu0 0
        %300 = vmatpush1.bf16.msra.mxu0 0
        %301 = vmatprep.subr.bf16.mxu0 0
        %302 = vmatpush1.bf16.msra.mxu0 0
        %303 = vmatprep.subr.bf16.mxu0 0
        %304 = vmatpush1.bf16.msra.mxu0 0
        %305 = vmatprep.subr.bf16.mxu0 0
        %306 = vmatpush1.bf16.msra.mxu0 0
        %307 = vmatprep.subr.bf16.mxu0 0
        %308 = vmatpush1.bf16.msra.mxu0 0
        %309 = vmatprep.subr.bf16.mxu0 0
        %310 = vmatpush1.bf16.msra.mxu0 0
        %311 = vmatprep.subr.bf16.mxu0 0
        %312 = vmatpush1.bf16.msra.mxu0 0
        %313 = vmatprep.subr.bf16.mxu0 0
        %314 = vmatpush1.bf16.msra.mxu0 0
        %315 = vmatprep.subr.bf16.mxu0 0
        %316 = vmatpush1.bf16.msra.mxu0 0
        %317 = vmatprep.subr.bf16.mxu0 0
        %318 = vmatpush1.bf16.msra.mxu0 0
        %319 = vmatprep.mubr.bf16.mxu0 0
        %320 = vmatmul.mubr.bf16.gmra.mrb[0].mxu0 %v285
        %v321 = vpop.f32.mrb[0].mxu0
        %v322 = vadd.f32 %v236, %v321
        %v323 = vpop.f32.mrb[0].mxu0
        %v324 = vadd.f32 %v240, %v323
        %v325 = vpop.f32.mrb[0].mxu0
        %v326 = vpop.f32.mrb[0].mxu0
        %327 = vdwg.mxu0
        %vm328 = vcmp.ge.f32.partialorder %v322, 0.0
        %vm329 = vcmp.ge.f32.partialorder %v324, 0.0
        %v330 = vmul.f32 %v322, 0.1
        %v331 = vmul.f32 %v324, 0.1
        %v332 = vsel %vm328, %v322, %v330
        %v333 = vsel %vm329, %v324, %v331
        %v334 = vpack.c.bf16 %v332, %v332
        %v335 = vpack.c.bf16 %v333, %v333
        %v336 = vld [vmem:[%s3] sm:$0xff]
        %v337 = vld [vmem:[%s3 + $0x8] sm:$0xff]
        %v338 = vld [vmem:[%s3 + $0x10] sm:$0xff]
        %v339 = vld [vmem:[%s3 + $0x18] sm:$0xf]
        %v340 = vld [vmem:[%s3 + $0x1c] sm:$0xff]
        %v341 = vld [vmem:[%s3 + $0x24] sm:$0xff]
        %v342 = vld [vmem:[%s3 + $0x2c] sm:$0xff]
        %v343 = vld [vmem:[%s3 + $0x34] sm:$0xf]
        %v344 = vld [vmem:[%s3 + $0x38] sm:$0xff]
        %v345 = vld [vmem:[%s3 + $0x40] sm:$0xff]
        %v346 = vld [vmem:[%s3 + $0x48] sm:$0xff]
        %v347 = vld [vmem:[%s3 + $0x50] sm:$0xf]
        %v348 = vld [vmem:[%s3 + $0x54] sm:$0xff]
        %v349 = vld [vmem:[%s3 + $0x5c] sm:$0xff]
        %v350 = vld [vmem:[%s3 + $0x64] sm:$0xff]
        %v351 = vld [vmem:[%s3 + $0x6c] sm:$0xf]
        %v352 = vld [vmem:[%s3 + $0x70] sm:$0xff]
        %v353 = vld [vmem:[%s3 + $0x78] sm:$0xff]
        %v354 = vld [vmem:[%s3 + $0x80] sm:$0xff]
        %v355 = vld [vmem:[%s3 + $0x88] sm:$0xf]
        %v356 = vld [vmem:[%s3 + $0x8c] sm:$0xff]
        %v357 = vld [vmem:[%s3 + $0x94] sm:$0xff]
        %v358 = vld [vmem:[%s3 + $0x9c] sm:$0xff]
        %v359 = vld [vmem:[%s3 + $0xa4] sm:$0xf]
        %v360 = vld [vmem:[%s3 + $0xa8] sm:$0xff]
        %v361 = vld [vmem:[%s3 + $0xb0] sm:$0xff]
        %v362 = vld [vmem:[%s3 + $0xb8] sm:$0xff]
        %v363 = vld [vmem:[%s3 + $0xc0] sm:$0xf]
        %v364 = vld [vmem:[%s3 + $0xc4] sm:$0xff]
        %v365 = vld [vmem:[%s3 + $0xcc] sm:$0xff]
        %v366 = vld [vmem:[%s3 + $0xd4] sm:$0xff]
        %v367 = vld [vmem:[%s3 + $0xdc] sm:$0xf]
        %v368 = vld [vmem:[%s3 + $0xe0] sm:$0xff]
        %v369 = vld [vmem:[%s3 + $0xe8] sm:$0xff]
        %v370 = vld [vmem:[%s3 + $0xf0] sm:$0xff]
        %v371 = vld [vmem:[%s3 + $0xf8] sm:$0xf]
        %v372 = vld [vmem:[%s3 + $0xfc] sm:$0xff]
        %v373 = vld [vmem:[%s3 + $0x104] sm:$0xff]
        %v374 = vld [vmem:[%s3 + $0x10c] sm:$0xff]
        %v375 = vld [vmem:[%s3 + $0x114] sm:$0xf]
        %v376 = vld [vmem:[%s3 + $0x118] sm:$0xff]
        %v377 = vld [vmem:[%s3 + $0x120] sm:$0xff]
        %v378 = vld [vmem:[%s3 + $0x128] sm:$0xff]
        %v379 = vld [vmem:[%s3 + $0x130] sm:$0xf]
        %v380 = vld [vmem:[%s3 + $0x134] sm:$0xff]
        %v381 = vld [vmem:[%s3 + $0x13c] sm:$0xff]
        %v382 = vld [vmem:[%s3 + $0x144] sm:$0xff]
        %v383 = vld [vmem:[%s3 + $0x14c] sm:$0xf]
        %v384 = vld [vmem:[%s3 + $0x150] sm:$0xff]
        %v385 = vld [vmem:[%s3 + $0x158] sm:$0xff]
        %v386 = vld [vmem:[%s3 + $0x160] sm:$0xff]
        %v387 = vld [vmem:[%s3 + $0x168] sm:$0xf]
        %v388 = vld [vmem:[%s3 + $0x16c] sm:$0xff]
        %v389 = vld [vmem:[%s3 + $0x174] sm:$0xff]
        %v390 = vld [vmem:[%s3 + $0x17c] sm:$0xff]
        %v391 = vld [vmem:[%s3 + $0x184] sm:$0xf]
        %v392 = vld [vmem:[%s3 + $0x188] sm:$0xff]
        %v393 = vld [vmem:[%s3 + $0x190] sm:$0xff]
        %v394 = vld [vmem:[%s3 + $0x198] sm:$0xff]
        %v395 = vld [vmem:[%s3 + $0x1a0] sm:$0xf]
        %v396 = vld [vmem:[%s3 + $0x1a4] sm:$0xff]
        %v397 = vld [vmem:[%s3 + $0x1ac] sm:$0xff]
        %v398 = vld [vmem:[%s3 + $0x1b4] sm:$0xff]
        %v399 = vld [vmem:[%s3 + $0x1bc] sm:$0xf]
        %v400 = vld [vmem:[%s3 + $0x1c0] sm:$0xff]
        %v401 = vld [vmem:[%s3 + $0x1c8] sm:$0xff]
        %v402 = vld [vmem:[%s3 + $0x1d0] sm:$0xff]
        %v403 = vld [vmem:[%s3 + $0x1d8] sm:$0xf]
        %v404 = vld [vmem:[%s3 + $0x1dc] sm:$0xff]
        %v405 = vld [vmem:[%s3 + $0x1e4] sm:$0xff]
        %v406 = vld [vmem:[%s3 + $0x1ec] sm:$0xff]
        %v407 = vld [vmem:[%s3 + $0x1f4] sm:$0xf]
        %v408 = vld [vmem:[%s3 + $0x1f8] sm:$0xff]
        %v409 = vld [vmem:[%s3 + $0x200] sm:$0xff]
        %v410 = vld [vmem:[%s3 + $0x208] sm:$0xff]
        %v411 = vld [vmem:[%s3 + $0x210] sm:$0xf]
        %v412 = vld [vmem:[%s3 + $0x214] sm:$0xff]
        %v413 = vld [vmem:[%s3 + $0x21c] sm:$0xff]
        %v414 = vld [vmem:[%s3 + $0x224] sm:$0xff]
        %v415 = vld [vmem:[%s3 + $0x22c] sm:$0xf]
        %v416 = vld [vmem:[%s3 + $0x230] sm:$0xff]
        %v417 = vld [vmem:[%s3 + $0x238] sm:$0xff]
        %v418 = vld [vmem:[%s3 + $0x240] sm:$0xff]
        %v419 = vld [vmem:[%s3 + $0x248] sm:$0xf]
        %v420 = vld [vmem:[%s3 + $0x24c] sm:$0xff]
        %v421 = vld [vmem:[%s3 + $0x254] sm:$0xff]
        %v422 = vld [vmem:[%s3 + $0x25c] sm:$0xff]
        %v423 = vld [vmem:[%s3 + $0x264] sm:$0xf]
        %v424 = vld [vmem:[%s3 + $0x268] sm:$0xff]
        %v425 = vld [vmem:[%s3 + $0x270] sm:$0xff]
        %v426 = vld [vmem:[%s3 + $0x278] sm:$0xff]
        %v427 = vld [vmem:[%s3 + $0x280] sm:$0xf]
        %v428 = vld [vmem:[%s3 + $0x284] sm:$0xff]
        %v429 = vld [vmem:[%s3 + $0x28c] sm:$0xff]
        %v430 = vld [vmem:[%s3 + $0x294] sm:$0xff]
        %v431 = vld [vmem:[%s3 + $0x29c] sm:$0xf]
        %v432 = vld [vmem:[%s3 + $0x2a0] sm:$0xff]
        %v433 = vld [vmem:[%s3 + $0x2a8] sm:$0xff]
        %v434 = vld [vmem:[%s3 + $0x2b0] sm:$0xff]
        %v435 = vld [vmem:[%s3 + $0x2b8] sm:$0xf]
        %v436 = vld [vmem:[%s3 + $0x2bc] sm:$0xff]
        %v437 = vld [vmem:[%s3 + $0x2c4] sm:$0xff]
        %v438 = vld [vmem:[%s3 + $0x2cc] sm:$0xff]
        %v439 = vld [vmem:[%s3 + $0x2d4] sm:$0xf]
        %v440 = vld [vmem:[%s3 + $0x2d8] sm:$0xff]
        %v441 = vld [vmem:[%s3 + $0x2e0] sm:$0xff]
        %v442 = vld [vmem:[%s3 + $0x2e8] sm:$0xff]
        %v443 = vld [vmem:[%s3 + $0x2f0] sm:$0xf]
        %v444 = vld [vmem:[%s3 + $0x2f4] sm:$0xff]
        %v445 = vld [vmem:[%s3 + $0x2fc] sm:$0xff]
        %v446 = vld [vmem:[%s3 + $0x304] sm:$0xff]
        %v447 = vld [vmem:[%s3 + $0x30c] sm:$0xf]
        %v448 = vld [vmem:[%s3 + $0x310] sm:$0xff]
        %v449 = vld [vmem:[%s3 + $0x318] sm:$0xff]
        %v450 = vld [vmem:[%s3 + $0x320] sm:$0xff]
        %v451 = vld [vmem:[%s3 + $0x328] sm:$0xf]
        %v452 = vld [vmem:[%s3 + $0x32c] sm:$0xff]
        %v453 = vld [vmem:[%s3 + $0x334] sm:$0xff]
        %v454 = vld [vmem:[%s3 + $0x33c] sm:$0xff]
        %v455 = vld [vmem:[%s3 + $0x344] sm:$0xf]
        %v456 = vld [vmem:[%s3 + $0x348] sm:$0xff]
        %v457 = vld [vmem:[%s3 + $0x350] sm:$0xff]
        %v458 = vld [vmem:[%s3 + $0x358] sm:$0xff]
        %v459 = vld [vmem:[%s3 + $0x360] sm:$0xf]
        %v460 = vld [vmem:[%s3 + $0x364] sm:$0xff]
        %v461 = vld [vmem:[%s3 + $0x36c] sm:$0xff]
        %v462 = vld [vmem:[%s3 + $0x374] sm:$0xff]
        %v463 = vld [vmem:[%s3 + $0x37c] sm:$0xf]
        %v464 = vld [vmem:[%s4] sm:$0x7f]
        %v466 = vlaneseq
        %v467 = vshrl.u32 %v466, 7
        %v468 = vsub.s32 0, %v467
        %v469 = vrot.slane %v464, %v468
        %v470 = vlaneseq
        %v471 = vshrl.u32 %v470, 7
        %v472 = vsub.s32 1, %v471
        %v473 = vrot.slane %v464, %v472
        %v474 = vlaneseq
        %v475 = vshrl.u32 %v474, 7
        %v476 = vsub.s32 2, %v475
        %v477 = vrot.slane %v464, %v476
        %v478 = vlaneseq
        %v479 = vshrl.u32 %v478, 7
        %v480 = vsub.s32 3, %v479
        %v481 = vrot.slane %v464, %v480
        %v482 = vlaneseq
        %v483 = vshrl.u32 %v482, 7
        %v484 = vsub.s32 4, %v483
        %v485 = vrot.slane %v464, %v484
        %v486 = vlaneseq
        %v487 = vshrl.u32 %v486, 7
        %v488 = vsub.s32 5, %v487
        %v489 = vrot.slane %v464, %v488
        %v490 = vlaneseq
        %v491 = vshrl.u32 %v490, 7
        %v492 = vsub.s32 6, %v491
        %v493 = vrot.slane %v464, %v492
        %v629 = vunpack.c.l.b16 %v336
        %v630 = vunpack.c.h.b16 %v336
        %v631 = vunpack.c.l.b16 %v337
        %v632 = vunpack.c.h.b16 %v337
        %v633 = vunpack.c.l.b16 %v338
        %v634 = vunpack.c.h.b16 %v338
        %v635 = vunpack.c.l.b16 %v339
        %v636 = vunpack.c.l.b16 %v340
        %v637 = vunpack.c.h.b16 %v340
        %v638 = vunpack.c.l.b16 %v341
        %v639 = vunpack.c.h.b16 %v341
        %v640 = vunpack.c.l.b16 %v342
        %v641 = vunpack.c.h.b16 %v342
        %v642 = vunpack.c.l.b16 %v343
        %v643 = vunpack.c.l.b16 %v344
        %v644 = vunpack.c.h.b16 %v344
        %v645 = vunpack.c.l.b16 %v345
        %v646 = vunpack.c.h.b16 %v345
        %v647 = vunpack.c.l.b16 %v346
        %v648 = vunpack.c.h.b16 %v346
        %v649 = vunpack.c.l.b16 %v347
        %v650 = vunpack.c.l.b16 %v348
        %v651 = vunpack.c.h.b16 %v348
        %v652 = vunpack.c.l.b16 %v349
        %v653 = vunpack.c.h.b16 %v349
        %v654 = vunpack.c.l.b16 %v350
        %v655 = vunpack.c.h.b16 %v350
        %v656 = vunpack.c.l.b16 %v351
        %v657 = vunpack.c.l.b16 %v352
        %v658 = vunpack.c.h.b16 %v352
        %v659 = vunpack.c.l.b16 %v353
        %v660 = vunpack.c.h.b16 %v353
        %v661 = vunpack.c.l.b16 %v354
        %v662 = vunpack.c.h.b16 %v354
        %v663 = vunpack.c.l.b16 %v355
        %v664 = vunpack.c.l.b16 %v356
        %v665 = vunpack.c.h.b16 %v356
        %v666 = vunpack.c.l.b16 %v357
        %v667 = vunpack.c.h.b16 %v357
        %v668 = vunpack.c.l.b16 %v358
        %v669 = vunpack.c.h.b16 %v358
        %v670 = vunpack.c.l.b16 %v359
        %v671 = vunpack.c.l.b16 %v360
        %v672 = vunpack.c.h.b16 %v360
        %v673 = vunpack.c.l.b16 %v361
        %v674 = vunpack.c.h.b16 %v361
        %v675 = vunpack.c.l.b16 %v362
        %v676 = vunpack.c.h.b16 %v362
        %v677 = vunpack.c.l.b16 %v363
        %v678 = vunpack.c.l.b16 %v364
        %v679 = vunpack.c.h.b16 %v364
        %v680 = vunpack.c.l.b16 %v365
        %v681 = vunpack.c.h.b16 %v365
        %v682 = vunpack.c.l.b16 %v366
        %v683 = vunpack.c.h.b16 %v366
        %v684 = vunpack.c.l.b16 %v367
        %v685 = vunpack.c.l.b16 %v368
        %v686 = vunpack.c.h.b16 %v368
        %v687 = vunpack.c.l.b16 %v369
        %v688 = vunpack.c.h.b16 %v369
        %v689 = vunpack.c.l.b16 %v370
        %v690 = vunpack.c.h.b16 %v370
        %v691 = vunpack.c.l.b16 %v371
        %v692 = vunpack.c.l.b16 %v372
        %v693 = vunpack.c.h.b16 %v372
        %v694 = vunpack.c.l.b16 %v373
        %v695 = vunpack.c.h.b16 %v373
        %v696 = vunpack.c.l.b16 %v374
        %v697 = vunpack.c.h.b16 %v374
        %v698 = vunpack.c.l.b16 %v375
        %v699 = vunpack.c.l.b16 %v376
        %v700 = vunpack.c.h.b16 %v376
        %v701 = vunpack.c.l.b16 %v377
        %v702 = vunpack.c.h.b16 %v377
        %v703 = vunpack.c.l.b16 %v378
        %v704 = vunpack.c.h.b16 %v378
        %v705 = vunpack.c.l.b16 %v379
        %v706 = vunpack.c.l.b16 %v380
        %v707 = vunpack.c.h.b16 %v380
        %v708 = vunpack.c.l.b16 %v381
        %v709 = vunpack.c.h.b16 %v381
        %v710 = vunpack.c.l.b16 %v382
        %v711 = vunpack.c.h.b16 %v382
        %v712 = vunpack.c.l.b16 %v383
        %v713 = vunpack.c.l.b16 %v384
        %v714 = vunpack.c.h.b16 %v384
        %v715 = vunpack.c.l.b16 %v385
        %v716 = vunpack.c.h.b16 %v385
        %v717 = vunpack.c.l.b16 %v386
        %v718 = vunpack.c.h.b16 %v386
        %v719 = vunpack.c.l.b16 %v387
        %v720 = vunpack.c.l.b16 %v388
        %v721 = vunpack.c.h.b16 %v388
        %v722 = vunpack.c.l.b16 %v389
        %v723 = vunpack.c.h.b16 %v389
        %v724 = vunpack.c.l.b16 %v390
        %v725 = vunpack.c.h.b16 %v390
        %v726 = vunpack.c.l.b16 %v391
        %v727 = vunpack.c.l.b16 %v392
        %v728 = vunpack.c.h.b16 %v392
        %v729 = vunpack.c.l.b16 %v393
        %v730 = vunpack.c.h.b16 %v393
        %v731 = vunpack.c.l.b16 %v394
        %v732 = vunpack.c.h.b16 %v394
        %v733 = vunpack.c.l.b16 %v395
        %v734 = vunpack.c.l.b16 %v396
        %v735 = vunpack.c.h.b16 %v396
        %v736 = vunpack.c.l.b16 %v397
        %v737 = vunpack.c.h.b16 %v397
        %v738 = vunpack.c.l.b16 %v398
        %v739 = vunpack.c.h.b16 %v398
        %v740 = vunpack.c.l.b16 %v399
        %v741 = vunpack.c.l.b16 %v400
        %v742 = vunpack.c.h.b16 %v400
        %v743 = vunpack.c.l.b16 %v401
        %v744 = vunpack.c.h.b16 %v401
        %v745 = vunpack.c.l.b16 %v402
        %v746 = vunpack.c.h.b16 %v402
        %v747 = vunpack.c.l.b16 %v403
        %v748 = vunpack.c.l.b16 %v404
        %v749 = vunpack.c.h.b16 %v404
        %v750 = vunpack.c.l.b16 %v405
        %v751 = vunpack.c.h.b16 %v405
        %v752 = vunpack.c.l.b16 %v406
        %v753 = vunpack.c.h.b16 %v406
        %v754 = vunpack.c.l.b16 %v407
        %v755 = vunpack.c.l.b16 %v408
        %v756 = vunpack.c.h.b16 %v408
        %v757 = vunpack.c.l.b16 %v409
        %v758 = vunpack.c.h.b16 %v409
        %v759 = vunpack.c.l.b16 %v410
        %v760 = vunpack.c.h.b16 %v410
        %v761 = vunpack.c.l.b16 %v411
        %v762 = vunpack.c.l.b16 %v412
        %v763 = vunpack.c.h.b16 %v412
        %v764 = vunpack.c.l.b16 %v413
        %v765 = vunpack.c.h.b16 %v413
        %v766 = vunpack.c.l.b16 %v414
        %v767 = vunpack.c.h.b16 %v414
        %v768 = vunpack.c.l.b16 %v415
        %v769 = vunpack.c.l.b16 %v416
        %v770 = vunpack.c.h.b16 %v416
        %v771 = vunpack.c.l.b16 %v417
        %v772 = vunpack.c.h.b16 %v417
        %v773 = vunpack.c.l.b16 %v418
        %v774 = vunpack.c.h.b16 %v418
        %v775 = vunpack.c.l.b16 %v419
        %v776 = vunpack.c.l.b16 %v420
        %v777 = vunpack.c.h.b16 %v420
        %v778 = vunpack.c.l.b16 %v421
        %v779 = vunpack.c.h.b16 %v421
        %v780 = vunpack.c.l.b16 %v422
        %v781 = vunpack.c.h.b16 %v422
        %v782 = vunpack.c.l.b16 %v423
        %v783 = vunpack.c.l.b16 %v424
        %v784 = vunpack.c.h.b16 %v424
        %v785 = vunpack.c.l.b16 %v425
        %v786 = vunpack.c.h.b16 %v425
        %v787 = vunpack.c.l.b16 %v426
        %v788 = vunpack.c.h.b16 %v426
        %v789 = vunpack.c.l.b16 %v427
        %v790 = vunpack.c.l.b16 %v428
        %v791 = vunpack.c.h.b16 %v428
        %v792 = vunpack.c.l.b16 %v429
        %v793 = vunpack.c.h.b16 %v429
        %v794 = vunpack.c.l.b16 %v430
        %v795 = vunpack.c.h.b16 %v430
        %v796 = vunpack.c.l.b16 %v431
        %v797 = vunpack.c.l.b16 %v432
        %v798 = vunpack.c.h.b16 %v432
        %v799 = vunpack.c.l.b16 %v433
        %v800 = vunpack.c.h.b16 %v433
        %v801 = vunpack.c.l.b16 %v434
        %v802 = vunpack.c.h.b16 %v434
        %v803 = vunpack.c.l.b16 %v435
        %v804 = vunpack.c.l.b16 %v436
        %v805 = vunpack.c.h.b16 %v436
        %v806 = vunpack.c.l.b16 %v437
        %v807 = vunpack.c.h.b16 %v437
        %v808 = vunpack.c.l.b16 %v438
        %v809 = vunpack.c.h.b16 %v438
        %v810 = vunpack.c.l.b16 %v439
        %v811 = vunpack.c.l.b16 %v440
        %v812 = vunpack.c.h.b16 %v440
        %v813 = vunpack.c.l.b16 %v441
        %v814 = vunpack.c.h.b16 %v441
        %v815 = vunpack.c.l.b16 %v442
        %v816 = vunpack.c.h.b16 %v442
        %v817 = vunpack.c.l.b16 %v443
        %v818 = vunpack.c.l.b16 %v444
        %v819 = vunpack.c.h.b16 %v444
        %v820 = vunpack.c.l.b16 %v445
        %v821 = vunpack.c.h.b16 %v445
        %v822 = vunpack.c.l.b16 %v446
        %v823 = vunpack.c.h.b16 %v446
        %v824 = vunpack.c.l.b16 %v447
        %v825 = vunpack.c.l.b16 %v448
        %v826 = vunpack.c.h.b16 %v448
        %v827 = vunpack.c.l.b16 %v449
        %v828 = vunpack.c.h.b16 %v449
        %v829 = vunpack.c.l.b16 %v450
        %v830 = vunpack.c.h.b16 %v450
        %v831 = vunpack.c.l.b16 %v451
        %v832 = vunpack.c.l.b16 %v452
        %v833 = vunpack.c.h.b16 %v452
        %v834 = vunpack.c.l.b16 %v453
        %v835 = vunpack.c.h.b16 %v453
        %v836 = vunpack.c.l.b16 %v454
        %v837 = vunpack.c.h.b16 %v454
        %v838 = vunpack.c.l.b16 %v455
        %v839 = vunpack.c.l.b16 %v456
        %v840 = vunpack.c.h.b16 %v456
        %v841 = vunpack.c.l.b16 %v457
        %v842 = vunpack.c.h.b16 %v457
        %v843 = vunpack.c.l.b16 %v458
        %v844 = vunpack.c.h.b16 %v458
        %v845 = vunpack.c.l.b16 %v459
        %v846 = vunpack.c.l.b16 %v460
        %v847 = vunpack.c.h.b16 %v460
        %v848 = vunpack.c.l.b16 %v461
        %v849 = vunpack.c.h.b16 %v461
        %v850 = vunpack.c.l.b16 %v462
        %v851 = vunpack.c.h.b16 %v462
        %v852 = vunpack.c.l.b16 %v463
        %v853 = vpack.c.b16 %v636, %v629
        %v854 = vpack.c.b16 %v637, %v630
        %v855 = vpack.c.b16 %v638, %v631
        %v856 = vpack.c.b16 %v639, %v632
        %v857 = vpack.c.b16 %v640, %v633
        %v858 = vpack.c.b16 %v641, %v634
        %v859 = vpack.c.b16 %v642, %v635
        %v860 = vpack.c.b16 %v650, %v643
        %v861 = vpack.c.b16 %v651, %v644
        %v862 = vpack.c.b16 %v652, %v645
        %v863 = vpack.c.b16 %v653, %v646
        %v864 = vpack.c.b16 %v654, %v647
        %v865 = vpack.c.b16 %v655, %v648
        %v866 = vpack.c.b16 %v656, %v649
        %v867 = vpack.c.b16 %v664, %v657
        %v868 = vpack.c.b16 %v665, %v658
        %v869 = vpack.c.b16 %v666, %v659
        %v870 = vpack.c.b16 %v667, %v660
        %v871 = vpack.c.b16 %v668, %v661
        %v872 = vpack.c.b16 %v669, %v662
        %v873 = vpack.c.b16 %v670, %v663
        %v874 = vpack.c.b16 %v678, %v671
        %v875 = vpack.c.b16 %v679, %v672
        %v876 = vpack.c.b16 %v680, %v673
        %v877 = vpack.c.b16 %v681, %v674
        %v878 = vpack.c.b16 %v682, %v675
        %v879 = vpack.c.b16 %v683, %v676
        %v880 = vpack.c.b16 %v684, %v677
        %v881 = vpack.c.b16 %v692, %v685
        %v882 = vpack.c.b16 %v693, %v686
        %v883 = vpack.c.b16 %v694, %v687
        %v884 = vpack.c.b16 %v695, %v688
        %v885 = vpack.c.b16 %v696, %v689
        %v886 = vpack.c.b16 %v697, %v690
        %v887 = vpack.c.b16 %v698, %v691
        %v888 = vpack.c.b16 %v706, %v699
        %v889 = vpack.c.b16 %v707, %v700
        %v890 = vpack.c.b16 %v708, %v701
        %v891 = vpack.c.b16 %v709, %v702
        %v892 = vpack.c.b16 %v710, %v703
        %v893 = vpack.c.b16 %v711, %v704
        %v894 = vpack.c.b16 %v712, %v705
        %v895 = vpack.c.b16 %v720, %v713
        %v896 = vpack.c.b16 %v721, %v714
        %v897 = vpack.c.b16 %v722, %v715
        %v898 = vpack.c.b16 %v723, %v716
        %v899 = vpack.c.b16 %v724, %v717
        %v900 = vpack.c.b16 %v725, %v718
        %v901 = vpack.c.b16 %v726, %v719
        %v902 = vpack.c.b16 %v734, %v727
        %v903 = vpack.c.b16 %v735, %v728
        %v904 = vpack.c.b16 %v736, %v729
        %v905 = vpack.c.b16 %v737, %v730
        %v906 = vpack.c.b16 %v738, %v731
        %v907 = vpack.c.b16 %v739, %v732
        %v908 = vpack.c.b16 %v740, %v733
        %v909 = vpack.c.b16 %v748, %v741
        %v910 = vpack.c.b16 %v749, %v742
        %v911 = vpack.c.b16 %v750, %v743
        %v912 = vpack.c.b16 %v751, %v744
        %v913 = vpack.c.b16 %v752, %v745
        %v914 = vpack.c.b16 %v753, %v746
        %v915 = vpack.c.b16 %v754, %v747
        %v916 = vpack.c.b16 %v762, %v755
        %v917 = vpack.c.b16 %v763, %v756
        %v918 = vpack.c.b16 %v764, %v757
        %v919 = vpack.c.b16 %v765, %v758
        %v920 = vpack.c.b16 %v766, %v759
        %v921 = vpack.c.b16 %v767, %v760
        %v922 = vpack.c.b16 %v768, %v761
        %v923 = vpack.c.b16 %v776, %v769
        %v924 = vpack.c.b16 %v777, %v770
        %v925 = vpack.c.b16 %v778, %v771
        %v926 = vpack.c.b16 %v779, %v772
        %v927 = vpack.c.b16 %v780, %v773
        %v928 = vpack.c.b16 %v781, %v774
        %v929 = vpack.c.b16 %v782, %v775
        %v930 = vpack.c.b16 %v790, %v783
        %v931 = vpack.c.b16 %v791, %v784
        %v932 = vpack.c.b16 %v792, %v785
        %v933 = vpack.c.b16 %v793, %v786
        %v934 = vpack.c.b16 %v794, %v787
        %v935 = vpack.c.b16 %v795, %v788
        %v936 = vpack.c.b16 %v796, %v789
        %v937 = vpack.c.b16 %v804, %v797
        %v938 = vpack.c.b16 %v805, %v798
        %v939 = vpack.c.b16 %v806, %v799
        %v940 = vpack.c.b16 %v807, %v800
        %v941 = vpack.c.b16 %v808, %v801
        %v942 = vpack.c.b16 %v809, %v802
        %v943 = vpack.c.b16 %v810, %v803
        %v944 = vpack.c.b16 %v818, %v811
        %v945 = vpack.c.b16 %v819, %v812
        %v946 = vpack.c.b16 %v820, %v813
        %v947 = vpack.c.b16 %v821, %v814
        %v948 = vpack.c.b16 %v822, %v815
        %v949 = vpack.c.b16 %v823, %v816
        %v950 = vpack.c.b16 %v824, %v817
        %v951 = vpack.c.b16 %v832, %v825
        %v952 = vpack.c.b16 %v833, %v826
        %v953 = vpack.c.b16 %v834, %v827
        %v954 = vpack.c.b16 %v835, %v828
        %v955 = vpack.c.b16 %v836, %v829
        %v956 = vpack.c.b16 %v837, %v830
        %v957 = vpack.c.b16 %v838, %v831
        %v958 = vpack.c.b16 %v846, %v839
        %v959 = vpack.c.b16 %v847, %v840
        %v960 = vpack.c.b16 %v848, %v841
        %v961 = vpack.c.b16 %v849, %v842
        %v962 = vpack.c.b16 %v850, %v843
        %v963 = vpack.c.b16 %v851, %v844
        %v964 = vpack.c.b16 %v852, %v845
        %1077 = vmatprep.subr.bf16.mxu0 %v854
        %1078 = vmatpush1.bf16.msra.mxu0 %v853
        %1079 = vmatprep.subr.bf16.mxu0 %v861
        %1080 = vmatpush1.bf16.msra.mxu0 %v860
        %1081 = vmatprep.subr.bf16.mxu0 %v868
        %1082 = vmatpush1.bf16.msra.mxu0 %v867
        %1083 = vmatprep.subr.bf16.mxu0 %v875
        %1084 = vmatpush1.bf16.msra.mxu0 %v874
        %1085 = vmatprep.subr.bf16.mxu0 %v882
        %1086 = vmatpush1.bf16.msra.mxu0 %v881
        %1087 = vmatprep.subr.bf16.mxu0 %v889
        %1088 = vmatpush1.bf16.msra.mxu0 %v888
        %1089 = vmatprep.subr.bf16.mxu0 %v896
        %1090 = vmatpush1.bf16.msra.mxu0 %v895
        %1091 = vmatprep.subr.bf16.mxu0 %v903
        %1092 = vmatpush1.bf16.msra.mxu0 %v902
        %1093 = vmatprep.subr.bf16.mxu0 %v910
        %1094 = vmatpush1.bf16.msra.mxu0 %v909
        %1095 = vmatprep.subr.bf16.mxu0 %v917
        %1096 = vmatpush1.bf16.msra.mxu0 %v916
        %1097 = vmatprep.subr.bf16.mxu0 %v924
        %1098 = vmatpush1.bf16.msra.mxu0 %v923
        %1099 = vmatprep.subr.bf16.mxu0 %v931
        %1100 = vmatpush1.bf16.msra.mxu0 %v930
        %1101 = vmatprep.subr.bf16.mxu0 %v938
        %1102 = vmatpush1.bf16.msra.mxu0 %v937
        %1103 = vmatprep.subr.bf16.mxu0 %v945
        %1104 = vmatpush1.bf16.msra.mxu0 %v944
        %1105 = vmatprep.subr.bf16.mxu0 %v952
        %1106 = vmatpush1.bf16.msra.mxu0 %v951
        %1107 = vmatprep.subr.bf16.mxu0 %v959
        %1108 = vmatpush1.bf16.msra.mxu0 %v958
        %1109 = vmatprep.mubr.bf16.mxu0 %v335
        %1110 = vmatmul.mubr.bf16.gmra.mrb[0].mxu0 %v334
        %v1111 = vpop.f32.mrb[0].mxu0
        %v1112 = vadd.f32 %v469, %v1111
        %v1113 = vpop.f32.mrb[0].mxu0
        %v1114 = vadd.f32 %v473, %v1113
        %v1115 = vpop.f32.mrb[0].mxu0
        %v1116 = vpop.f32.mrb[0].mxu0
        %1117 = vdwg.mxu0
        %1118 = vmatprep.subr.bf16.mxu0 %v856
        %1119 = vmatpush1.bf16.msra.mxu0 %v855
        %1120 = vmatprep.subr.bf16.mxu0 %v863
        %1121 = vmatpush1.bf16.msra.mxu0 %v862
        %1122 = vmatprep.subr.bf16.mxu0 %v870
        %1123 = vmatpush1.bf16.msra.mxu0 %v869
        %1124 = vmatprep.subr.bf16.mxu0 %v877
        %1125 = vmatpush1.bf16.msra.mxu0 %v876
        %1126 = vmatprep.subr.bf16.mxu0 %v884
        %1127 = vmatpush1.bf16.msra.mxu0 %v883
        %1128 = vmatprep.subr.bf16.mxu0 %v891
        %1129 = vmatpush1.bf16.msra.mxu0 %v890
        %1130 = vmatprep.subr.bf16.mxu0 %v898
        %1131 = vmatpush1.bf16.msra.mxu0 %v897
        %1132 = vmatprep.subr.bf16.mxu0 %v905
        %1133 = vmatpush1.bf16.msra.mxu0 %v904
        %1134 = vmatprep.subr.bf16.mxu0 %v912
        %1135 = vmatpush1.bf16.msra.mxu0 %v911
        %1136 = vmatprep.subr.bf16.mxu0 %v919
        %1137 = vmatpush1.bf16.msra.mxu0 %v918
        %1138 = vmatprep.subr.bf16.mxu0 %v926
        %1139 = vmatpush1.bf16.msra.mxu0 %v925
        %1140 = vmatprep.subr.bf16.mxu0 %v933
        %1141 = vmatpush1.bf16.msra.mxu0 %v932
        %1142 = vmatprep.subr.bf16.mxu0 %v940
        %1143 = vmatpush1.bf16.msra.mxu0 %v939
        %1144 = vmatprep.subr.bf16.mxu0 %v947
        %1145 = vmatpush1.bf16.msra.mxu0 %v946
        %1146 = vmatprep.subr.bf16.mxu0 %v954
        %1147 = vmatpush1.bf16.msra.mxu0 %v953
        %1148 = vmatprep.subr.bf16.mxu0 %v961
        %1149 = vmatpush1.bf16.msra.mxu0 %v960
        %1150 = vmatprep.mubr.bf16.mxu0 %v335
        %1151 = vmatmul.mubr.bf16.gmra.mrb[0].mxu0 %v334
        %v1152 = vpop.f32.mrb[0].mxu0
        %v1153 = vadd.f32 %v477, %v1152
        %v1154 = vpop.f32.mrb[0].mxu0
        %v1155 = vadd.f32 %v481, %v1154
        %v1156 = vpop.f32.mrb[0].mxu0
        %v1157 = vpop.f32.mrb[0].mxu0
        %1158 = vdwg.mxu0
        %1159 = vmatprep.subr.bf16.mxu0 %v858
        %1160 = vmatpush1.bf16.msra.mxu0 %v857
        %1161 = vmatprep.subr.bf16.mxu0 %v865
        %1162 = vmatpush1.bf16.msra.mxu0 %v864
        %1163 = vmatprep.subr.bf16.mxu0 %v872
        %1164 = vmatpush1.bf16.msra.mxu0 %v871
        %1165 = vmatprep.subr.bf16.mxu0 %v879
        %1166 = vmatpush1.bf16.msra.mxu0 %v878
        %1167 = vmatprep.subr.bf16.mxu0 %v886
        %1168 = vmatpush1.bf16.msra.mxu0 %v885
        %1169 = vmatprep.subr.bf16.mxu0 %v893
        %1170 = vmatpush1.bf16.msra.mxu0 %v892
        %1171 = vmatprep.subr.bf16.mxu0 %v900
        %1172 = vmatpush1.bf16.msra.mxu0 %v899
        %1173 = vmatprep.subr.bf16.mxu0 %v907
        %1174 = vmatpush1.bf16.msra.mxu0 %v906
        %1175 = vmatprep.subr.bf16.mxu0 %v914
        %1176 = vmatpush1.bf16.msra.mxu0 %v913
        %1177 = vmatprep.subr.bf16.mxu0 %v921
        %1178 = vmatpush1.bf16.msra.mxu0 %v920
        %1179 = vmatprep.subr.bf16.mxu0 %v928
        %1180 = vmatpush1.bf16.msra.mxu0 %v927
        %1181 = vmatprep.subr.bf16.mxu0 %v935
        %1182 = vmatpush1.bf16.msra.mxu0 %v934
        %1183 = vmatprep.subr.bf16.mxu0 %v942
        %1184 = vmatpush1.bf16.msra.mxu0 %v941
        %1185 = vmatprep.subr.bf16.mxu0 %v949
        %1186 = vmatpush1.bf16.msra.mxu0 %v948
        %1187 = vmatprep.subr.bf16.mxu0 %v956
        %1188 = vmatpush1.bf16.msra.mxu0 %v955
        %1189 = vmatprep.subr.bf16.mxu0 %v963
        %1190 = vmatpush1.bf16.msra.mxu0 %v962
        %1191 = vmatprep.mubr.bf16.mxu0 %v335
        %1192 = vmatmul.mubr.bf16.gmra.mrb[0].mxu0 %v334
        %v1193 = vpop.f32.mrb[0].mxu0
        %v1194 = vadd.f32 %v485, %v1193
        %v1195 = vpop.f32.mrb[0].mxu0
        %v1196 = vadd.f32 %v489, %v1195
        %v1197 = vpop.f32.mrb[0].mxu0
        %v1198 = vpop.f32.mrb[0].mxu0
        %1199 = vdwg.mxu0
        %1200 = vmatprep.subr.bf16.mxu0 0
        %1201 = vmatpush1.bf16.msra.mxu0 %v859
        %1202 = vmatprep.subr.bf16.mxu0 0
        %1203 = vmatpush1.bf16.msra.mxu0 %v866
        %1204 = vmatprep.subr.bf16.mxu0 0
        %1205 = vmatpush1.bf16.msra.mxu0 %v873
        %1206 = vmatprep.subr.bf16.mxu0 0
        %1207 = vmatpush1.bf16.msra.mxu0 %v880
        %1208 = vmatprep.subr.bf16.mxu0 0
        %1209 = vmatpush1.bf16.msra.mxu0 %v887
        %1210 = vmatprep.subr.bf16.mxu0 0
        %1211 = vmatpush1.bf16.msra.mxu0 %v894
        %1212 = vmatprep.subr.bf16.mxu0 0
        %1213 = vmatpush1.bf16.msra.mxu0 %v901
        %1214 = vmatprep.subr.bf16.mxu0 0
        %1215 = vmatpush1.bf16.msra.mxu0 %v908
        %1216 = vmatprep.subr.bf16.mxu0 0
        %1217 = vmatpush1.bf16.msra.mxu0 %v915
        %1218 = vmatprep.subr.bf16.mxu0 0
        %1219 = vmatpush1.bf16.msra.mxu0 %v922
        %1220 = vmatprep.subr.bf16.mxu0 0
        %1221 = vmatpush1.bf16.msra.mxu0 %v929
        %1222 = vmatprep.subr.bf16.mxu0 0
        %1223 = vmatpush1.bf16.msra.mxu0 %v936
        %1224 = vmatprep.subr.bf16.mxu0 0
        %1225 = vmatpush1.bf16.msra.mxu0 %v943
        %1226 = vmatprep.subr.bf16.mxu0 0
        %1227 = vmatpush1.bf16.msra.mxu0 %v950
        %1228 = vmatprep.subr.bf16.mxu0 0
        %1229 = vmatpush1.bf16.msra.mxu0 %v957
        %1230 = vmatprep.subr.bf16.mxu0 0
        %1231 = vmatpush1.bf16.msra.mxu0 %v964
        %1232 = vmatprep.mubr.bf16.mxu0 %v335
        %1233 = vmatmul.mubr.bf16.gmra.mrb[0].mxu0 %v334
        %v1234 = vpop.f32.mrb[0].mxu0
        %v1235 = vadd.f32 %v493, %v1234
        %v1236 = vpop.f32.mrb[0].mxu0
        %v1237 = vpop.f32.mrb[0].mxu0
        %v1238 = vpop.f32.mrb[0].mxu0
        %1239 = vdwg.mxu0
        %v1240 = vtanh.pop %v1112
        %v1241 = vtanh.pop %v1114
        %v1242 = vtanh.pop %v1153
        %v1243 = vtanh.pop %v1155
        %v1244 = vtanh.pop %v1194
        %v1245 = vtanh.pop %v1196
        %v1246 = vtanh.pop %v1235
        %v1247 = vpack.c.bf16 %v1240, %v1240
        %v1248 = vpack.c.bf16 %v1241, %v1241
        %v1249 = vpack.c.bf16 %v1242, %v1242
        %v1250 = vpack.c.bf16 %v1243, %v1243
        %v1251 = vpack.c.bf16 %v1244, %v1244
        %v1252 = vpack.c.bf16 %v1245, %v1245
        %v1253 = vpack.c.bf16 %v1246, %v1246
        %v1261 = vunpack.c.l.b16 %v1247
        %v1262 = vunpack.c.l.b16 %v1248
        %v1263 = vunpack.c.l.b16 %v1249
        %v1264 = vunpack.c.l.b16 %v1250
        %v1265 = vunpack.c.l.b16 %v1251
        %v1266 = vunpack.c.l.b16 %v1252
        %v1267 = vunpack.c.l.b16 %v1253
        %v1268 = vpack.c.b16 %v1262, %v1261
        %v1269 = vpack.c.b16 %v1264, %v1263
        %v1270 = vpack.c.b16 %v1266, %v1265
        %v1271 = vpack.c.b16 %v1267, %v1267
        %1276 = vst [vmem:[%s215] sm:$0xff] %v1268
        %1277 = vst [vmem:[%s215 + $0x8] sm:$0xff] %v1269
        %1278 = vst [vmem:[%s215 + $0x10] sm:$0xff] %v1270
        %vm1279 = vcmask 125952
        %1280 = vst.msk [vmem:[%s215 + $0x18] sm:$0xf] %vm1279, %v1271
        %s1281 = sand.u32 %s137, 1
        %s1282 = scalar_lea.sflag [#allocation3], %s1281
        %s1283 = sand.u32 %s137, 1
        %s1284 = smul.addr %s1283, 28
        %s1285 = scalar_lea.vmem [#allocation2], %s1284
        // Predicated region
        $region41: #{_generator_forward_jit.1} parent=39 // pred_check
          %p1286 = pneg %p147
        $region42: #{_generator_forward_jit.1} parent=39 // pred_check_branch
          %1288 = sbr.rel (%p1286) target = $region44
        $region43: #{_generator_forward_jit.1} parent=39 // pred_region
          %s1290 = ssub.s32 448, 448
          %1291 = vsyncadd %s1282, %s1290
          %s1292 = smul.addr %s19, 7
          %s1293 = smul.addr %s1292, 64
          %s1294 = scalar_lea.hbm %s5, %s1293
          %s1296 = sshll.u32 %s1285, 4
          %s1297 = int_to_ptr.vmem [resolvable:$true] %s1296
          %1299 = dma.vmem_to_hbm [thread:$0]  %s1297, 448, %s1294, %s1282
        $region44: #{_generator_forward_jit.1} parent=39 // pred_fallthru
          _
      $region40: #{_generator_forward_jit.1} parent=5 // pred_fallthru
        _
      %p1300 = scmp.le.s32.totalorder 2, %s14
      // Predicated region
      $region45: #{_generator_forward_jit.1} parent=5 // pred_check
        %p1301 = pneg %p1300
      $region46: #{_generator_forward_jit.1} parent=5 // pred_check_branch
        %1303 = sbr.rel (%p1301) target = $region48
      $region47: #{_generator_forward_jit.1} parent=5 // pred_region
        %s1304 = ssub.s32 %s14, 2
        // Predicated region
        $region49: #{_generator_forward_jit.1} parent=47 // pred_check
          %p1305 = pneg %p153
        $region50: #{_generator_forward_jit.1} parent=47 // pred_check_branch
          %1307 = sbr.rel (%p1305) target = $region52
        $region51: #{_generator_forward_jit.1} parent=47 // pred_region
          %s1308 = sand.u32 %s138, 1
          %s1309 = scalar_lea.sflag [#allocation3], %s1308
          %s1310 = sand.u32 %s138, 1
          %s1311 = smul.addr %s1310, 28
          %s1312 = scalar_lea.vmem [#allocation2], %s1311
          %1313 = dma.done %s1309, 448
        $region52: #{_generator_forward_jit.1} parent=47 // pred_fallthru
          _
      $region48: #{_generator_forward_jit.1} parent=5 // pred_fallthru
        _
    $region6: #{_generator_forward_jit.1} parent=1 // loop_footer
      %s18 = sadd.s32 1, %s14
    $region7: #{_generator_forward_jit.1} parent=1 // loop_footer_branch
      %13 = sbr.rel target = $region3
    $region8: #{_generator_forward_jit.1} parent=1 // loop_exit
      _
    %1314 = vsyncpa [#allocation3], 1
    %s1315 = scalar_lea.sflag [#allocation3], 1
    %1316 = vsyncpa %s1315, 1

</llo_original>
